<compile_context>
chip_gen: v5e
topology: v5e:2x2
jax: 0.10.0
libtpu: 0.0.40
codegen_flags: <defaults>
</compile_context>

<pallas_src>
import functools
import numpy as np
import jax
import jax.numpy as jnp
from jax import lax
from jax.experimental import pallas as pl
from jax.experimental.pallas import tpu as pltpu


def _round_up(x, m):
    return (x + m - 1) // m * m


def _sparse_conv_kernel(x_ref, w_ref, o_ref, *, K, sub_ho, n_sub, wo_pad,
                        kcin, tile_cout, stride):
    # x_ref : (hp_pad, wo_pad, K*Cin)        bf16, whole padded image, kw taps folded
    # w_ref : (K, K*Cin, tile_cout)          bf16, mask folded
    # o_ref : (tile_ho, wo_pad, tile_cout)   bf16, tile_ho = n_sub * sub_ho
    rb = pl.program_id(2)
    tile_ho = n_sub * sub_ho
    row_base = pl.multiple_of(rb * (tile_ho * stride), tile_ho * stride)
    m_sub = sub_ho * wo_pad

    def compute_sub(s):
        r0 = row_base + s * (sub_ho * stride)
        acc = jnp.zeros((m_sub, tile_cout), jnp.float32)
        for kh in range(K):                       # K dots, contraction = K*Cin
            if stride == 1:
                lhs = x_ref[pl.ds(r0 + kh, sub_ho)]
            else:
                lhs = x_ref[pl.ds(r0 + kh, sub_ho, stride=stride)]
            acc = acc + jnp.dot(lhs.reshape(m_sub, kcin), w_ref[kh],
                                preferred_element_type=jnp.float32)
        o_ref[pl.ds(s * sub_ho, sub_ho)] = (
            acc.reshape(sub_ho, wo_pad, tile_cout).astype(o_ref.dtype))

    if n_sub == 1:
        compute_sub(0)
    else:
        def body(s, carry):
            compute_sub(s)
            return carry
        lax.fori_loop(0, n_sub, body, 0, unroll=True)


@functools.partial(jax.jit, static_argnames=(
    "stride", "padding", "temp", "ticket", "mask_initial_value"))
def sparse_conv2d(x_nchw, weight_oihw, mask_weight_oihw, *,
                  stride=1, padding=1, temp=1.0, ticket=False,
                  mask_initial_value=0.0):
    """SparseConv.forward of a SoftMaskedConv2d (inputs NCHW/OIHW, returns NCHW).

    NOTE: SoftMaskedConv2d has no bias, so the fused dense form keeps the
    ZeroConv output channels exactly zero (matching SparseConv's concatenation).
    """
    N, Cin, H, W = x_nchw.shape
    Cout, Cin_w, K, K2 = weight_oihw.shape
    assert Cin == Cin_w and K == K2

    Ho = (H + 2 * padding - K) // stride + 1
    Wo = (W + 2 * padding - K) // stride + 1

    # ---- fold the mask into the weights once (tiny fused XLA op) ----
    scaling = 1.0 / float(1.0 / (1.0 + np.exp(-mask_initial_value)))
    if ticket:
        mask = (mask_weight_oihw > 0).astype(weight_oihw.dtype)
    else:
        mask = jax.nn.sigmoid(temp * mask_weight_oihw)
    wm = weight_oihw * (scaling * mask)                     # OIHW, f32

    # ---- padded / tiled geometry ----
    cout_pad = _round_up(Cout, 128)                         # lane-dense output channels
    tile_cout = 256 if cout_pad % 256 == 0 else 128         # 256 fills v6e/v7x MXU N dim
    n_cb = cout_pad // tile_cout
    wo_pad = _round_up(Wo, 16)                              # bf16 sublane-aligned width
    kcin = K * Cin

    # per-step M ~512 to amortize step overhead; sub-blocks keep the f32
    # accumulator <= 32 vregs (128 KiB).
    target_m = 512
    acc_budget = 128 * 1024
    rows_wanted = max(1, min(Ho, pl.cdiv(target_m, wo_pad)))
    sub_ho = max(1, min(rows_wanted, acc_budget // (wo_pad * tile_cout * 4)))
    n_sub = pl.cdiv(rows_wanted, sub_ho)
    tile_ho = n_sub * sub_ho
    n_rb = pl.cdiv(Ho, tile_ho)
    ho_pad = n_rb * tile_ho

    hp_need = (ho_pad - 1) * stride + K
    wp_need = (wo_pad - 1) * stride + K
    pad_bottom = max(0, hp_need - H - padding)
    pad_right = max(0, wp_need - W - padding)

    # ---- activations: NHWC, zero-pad, fold kw taps into the channel dim ----
    x = jnp.transpose(x_nchw, (0, 2, 3, 1))                 # (N, H, W, Cin)
    x = jnp.pad(x, ((0, 0),
                    (padding, pad_bottom),
                    (padding, pad_right),
                    (0, 0)))
    hp_pad = x.shape[1]
    taps = [lax.slice_in_dim(x, kw, kw + (wo_pad - 1) * stride + 1, stride, axis=2)
            for kw in range(K)]                              # each (N, hp_pad, wo_pad, Cin)
    x_kw = jnp.concatenate(taps, axis=-1).astype(jnp.bfloat16)   # (N, hp_pad, wo_pad, K*Cin)

    # ---- weights: (K, K*Cin, Cout_pad), mask folded, bf16 ----
    w = jnp.transpose(wm, (2, 3, 1, 0))                      # (K, K, Cin, Cout)
    w = jnp.pad(w, ((0, 0), (0, 0), (0, 0), (0, cout_pad - Cout)))
    w = w.reshape(K, kcin, cout_pad).astype(jnp.bfloat16)

    kernel = functools.partial(
        _sparse_conv_kernel,
        K=K, sub_ho=sub_ho, n_sub=n_sub, wo_pad=wo_pad,
        kcin=kcin, tile_cout=tile_cout, stride=stride)

    # ---- generation-aware VMEM budget (account for Mosaic lane padding) ----
    x_blk = hp_pad * _round_up(wo_pad, 16) * _round_up(kcin, 128) * 2
    w_blk = K * _round_up(kcin, 16) * tile_cout * 2
    o_blk = tile_ho * _round_up(wo_pad, 16) * tile_cout * 2
    vmem_need = 2 * (x_blk + w_blk + o_blk)                  # double-buffered blocks
    try:
        vmem_cap = int(pltpu.get_tpu_info().vmem_capacity_bytes)
    except Exception:
        vmem_cap = 64 * 2**20                                # conservative (v7x per-TC)
    vmem_limit = int(min(0.9 * vmem_cap, max(0.7 * vmem_cap, 1.25 * vmem_need)))

    flops = 2 * N * ho_pad * wo_pad * K * kcin * cout_pad
    bytes_accessed = (x_kw.size * 2 + w.size * 2
                      + N * ho_pad * wo_pad * cout_pad * 2)

    out = pl.pallas_call(
        kernel,
        out_shape=jax.ShapeDtypeStruct((N, ho_pad, wo_pad, cout_pad), jnp.bfloat16),
        grid_spec=pltpu.PrefetchScalarGridSpec(
            num_scalar_prefetch=0,
            grid=(N, n_cb, n_rb),
            in_specs=[
                # whole (small) padded image per batch element; x's block index only
                # changes with b, so it is DMA'd once per batch element and row
                # blocks are sliced in-kernel with pl.ds (no halo duplication).
                pl.BlockSpec((None, hp_pad, wo_pad, kcin),
                             lambda b, cj, rb: (b, 0, 0, 0)),
                pl.BlockSpec((K, kcin, tile_cout),
                             lambda b, cj, rb: (0, 0, cj)),
            ],
            out_specs=pl.BlockSpec((None, tile_ho, wo_pad, tile_cout),
                                   lambda b, cj, rb: (b, rb, 0, cj)),
        ),
        compiler_params=pltpu.CompilerParams(
            dimension_semantics=("parallel", "parallel", "parallel"),
            vmem_limit_bytes=vmem_limit),
        cost_estimate=pl.CostEstimate(flops=flops, transcendentals=0,
                                      bytes_accessed=bytes_accessed),
    )(x_kw, w)

    out = out[:, :Ho, :Wo, :Cout].astype(x_nchw.dtype)       # drop padding, back to f32
    return jnp.transpose(out, (0, 3, 1, 2))                  # NCHW


if __name__ == "__main__":
    key = jax.random.PRNGKey(0)
    kx1, kw1, kx3, kw3, km3 = jax.random.split(key, 5)

    def xavier(k, cout, cin, ks):
        fan_in, fan_out = cin * ks * ks, cout * ks * ks
        std = float(np.sqrt(2.0 / (fan_in + fan_out)))
        return std * jax.random.normal(k, (cout, cin, ks, ks), jnp.float32)

    def reference(xa, wma, stride, padding):
        # quantize the same way the kernel does (bf16 MXU operands, f32 accumulation)
        xq = xa.astype(jnp.bfloat16).astype(jnp.float32)
        wq = wma.astype(jnp.bfloat16).astype(jnp.float32)
        return lax.conv_general_dilated(
            xq, wq, window_strides=(stride, stride),
            padding=[(padding, padding), (padding, padding)],
            dimension_numbers=("NCHW", "OIHW", "NCHW"),
            precision=lax.Precision.HIGHEST)

    mask_initial_value = 0.0
    scaling = 1.0 / float(1.0 / (1.0 + np.exp(-mask_initial_value)))

    # ---------- case 1: small shape, ticket mode, pruned channels 2 & 5 ----------
    # These become ZeroConv runs inside SparseConv -> must be exact zeros.
    in_c, out_c, K, stride, padding = 4, 8, 3, 1, 1
    N, H, W = 2, 16, 16
    weight = xavier(kw1, out_c, in_c, K)
    x = jax.random.normal(kx1, (N, in_c, H, W), jnp.float32)
    mask_weight = jnp.ones_like(weight).at[jnp.array([2, 5])].set(-1.0)

    out1 = sparse_conv2d(x, weight, mask_weight, stride=stride, padding=padding,
                         temp=1.0, ticket=True, mask_initial_value=mask_initial_value)
    out1 = jax.block_until_ready(out1)
    wm1 = weight * (scaling * (mask_weight > 0).astype(jnp.float32))
    ref1 = reference(x, wm1, stride, padding)
    np.testing.assert_allclose(np.asarray(out1), np.asarray(ref1), atol=2e-3, rtol=2e-2)
    assert np.all(np.asarray(out1)[:, [2, 5]] == 0.0), "ZeroConv channels must be exact zeros"

    # ---------- case 2: small shape, soft-mask (sigmoid) path ----------
    mask_weight2 = jnp.full_like(weight, mask_initial_value)
    out2 = sparse_conv2d(x, weight, mask_weight2, stride=stride, padding=padding,
                         temp=2.0, ticket=False, mask_initial_value=mask_initial_value)
    out2 = jax.block_until_ready(out2)
    wm2 = weight * (scaling * jax.nn.sigmoid(2.0 * mask_weight2))
    ref2 = reference(x, wm2, stride, padding)
    np.testing.assert_allclose(np.asarray(out2), np.asarray(ref2), atol=2e-3, rtol=2e-2)

    # ---------- case 3: exercises Cout grid axis, in-kernel sub-blocking, stride=2 ----------
    in_c3, out_c3, K3, stride3, padding3 = 8, 512, 3, 2, 1
    N3, H3, W3 = 2, 18, 18
    weight3 = xavier(kw3, out_c3, in_c3, K3)
    x3 = jax.random.normal(kx3, (N3, in_c3, H3, W3), jnp.float32)
    mask_weight3 = jax.random.normal(km3, weight3.shape, jnp.float32)

    out3 = sparse_conv2d(x3, weight3, mask_weight3, stride=stride3, padding=padding3,
                         temp=0.5, ticket=False, mask_initial_value=mask_initial_value)
    out3 = jax.block_until_ready(out3)
    wm3 = weight3 * (scaling * jax.nn.sigmoid(0.5 * mask_weight3))
    ref3 = reference(x3, wm3, stride3, padding3)
    np.testing.assert_allclose(np.asarray(out3), np.asarray(ref3), atol=2e-3, rtol=2e-2)

    print("KERNEL_OK")
</pallas_src>

<mosaic_0001>
module attributes {stable_mosaic.version = 11 : i64} {
  func.func @_sparse_conv_kernel(%arg0: i32, %arg1: i32, %arg2: i32, %arg3: memref<1x18x16x12xbf16, #tpu.memory_space<vmem>>, %arg4: memref<3x12x128xbf16, #tpu.memory_space<vmem>>, %arg5: memref<1x16x16x128xbf16, #tpu.memory_space<vmem>>) attributes {dimension_semantics = [#tpu.dimension_semantics<parallel>, #tpu.dimension_semantics<parallel>, #tpu.dimension_semantics<parallel>], iteration_bounds = array<i64: 2, 1, 1>, scalar_prefetch = 0 : i64, scratch_operands = 0 : i64, tpu.core_type = #tpu.core_type<tc>, window_params = [{transform_indices = @transform_0, window_bounds = array<i64: 1, 18, 16, 12>}, {transform_indices = @transform_1, window_bounds = array<i64: 3, 12, 128>}, {transform_indices = @transform_2, window_bounds = array<i64: 1, 16, 16, 128>}]} {
    %c16_i32 = arith.constant 16 : i32
    %0 = arith.muli %arg2, %c16_i32 : i32
    %1 = tpu.assume_multiple %0, 16 : i32
    %c0_i32 = arith.constant 0 : i32
    %2 = arith.addi %1, %c0_i32 : i32
    %cst = arith.constant 0.000000e+00 : f32
    %3 = vector.broadcast %cst : f32 to vector<256x128xf32>
    %c0_i32_0 = arith.constant 0 : i32
    %4 = arith.addi %2, %c0_i32_0 : i32
    %c0 = arith.constant 0 : index
    %5 = arith.index_cast %4 : i32 to index
    %c0_1 = arith.constant 0 : index
    %c0_2 = arith.constant 0 : index
    %6 = vector.load %arg3[%c0, %5, %c0_1, %c0_2] : memref<1x18x16x12xbf16, #tpu.memory_space<vmem>>, vector<1x16x16x12xbf16>
    %7 = vector.shape_cast %6 : vector<1x16x16x12xbf16> to vector<16x16x12xbf16>
    %8 = vector.shape_cast %7 : vector<16x16x12xbf16> to vector<256x12xbf16>
    %c0_3 = arith.constant 0 : index
    %c0_4 = arith.constant 0 : index
    %c0_5 = arith.constant 0 : index
    %9 = vector.load %arg4[%c0_3, %c0_4, %c0_5] : memref<3x12x128xbf16, #tpu.memory_space<vmem>>, vector<1x12x128xbf16>
    %10 = vector.shape_cast %9 : vector<1x12x128xbf16> to vector<12x128xbf16>
    %cst_6 = arith.constant dense<0.000000e+00> : vector<256x128xf32>
    %11 = tpu.matmul %8, %10, %cst_6 {dimension_numbers = #tpu.dot_dimension_numbers<[1], [0], [0], [1], [0, 0, 1, 1], [], []>} : vector<256x12xbf16>, vector<12x128xbf16>, vector<256x128xf32> -> vector<256x128xf32>
    %12 = arith.addf %3, %11 : vector<256x128xf32>
    %c1_i32 = arith.constant 1 : i32
    %13 = arith.addi %2, %c1_i32 : i32
    %c0_7 = arith.constant 0 : index
    %14 = arith.index_cast %13 : i32 to index
    %c0_8 = arith.constant 0 : index
    %c0_9 = arith.constant 0 : index
    %15 = vector.load %arg3[%c0_7, %14, %c0_8, %c0_9] : memref<1x18x16x12xbf16, #tpu.memory_space<vmem>>, vector<1x16x16x12xbf16>
    %16 = vector.shape_cast %15 : vector<1x16x16x12xbf16> to vector<16x16x12xbf16>
    %17 = vector.shape_cast %16 : vector<16x16x12xbf16> to vector<256x12xbf16>
    %c1 = arith.constant 1 : index
    %c0_10 = arith.constant 0 : index
    %c0_11 = arith.constant 0 : index
    %18 = vector.load %arg4[%c1, %c0_10, %c0_11] : memref<3x12x128xbf16, #tpu.memory_space<vmem>>, vector<1x12x128xbf16>
    %19 = vector.shape_cast %18 : vector<1x12x128xbf16> to vector<12x128xbf16>
    %cst_12 = arith.constant dense<0.000000e+00> : vector<256x128xf32>
    %20 = tpu.matmul %17, %19, %cst_12 {dimension_numbers = #tpu.dot_dimension_numbers<[1], [0], [0], [1], [0, 0, 1, 1], [], []>} : vector<256x12xbf16>, vector<12x128xbf16>, vector<256x128xf32> -> vector<256x128xf32>
    %21 = arith.addf %12, %20 : vector<256x128xf32>
    %c2_i32 = arith.constant 2 : i32
    %22 = arith.addi %2, %c2_i32 : i32
    %c0_13 = arith.constant 0 : index
    %23 = arith.index_cast %22 : i32 to index
    %c0_14 = arith.constant 0 : index
    %c0_15 = arith.constant 0 : index
    %24 = vector.load %arg3[%c0_13, %23, %c0_14, %c0_15] : memref<1x18x16x12xbf16, #tpu.memory_space<vmem>>, vector<1x16x16x12xbf16>
    %25 = vector.shape_cast %24 : vector<1x16x16x12xbf16> to vector<16x16x12xbf16>
    %26 = vector.shape_cast %25 : vector<16x16x12xbf16> to vector<256x12xbf16>
    %c2 = arith.constant 2 : index
    %c0_16 = arith.constant 0 : index
    %c0_17 = arith.constant 0 : index
    %27 = vector.load %arg4[%c2, %c0_16, %c0_17] : memref<3x12x128xbf16, #tpu.memory_space<vmem>>, vector<1x12x128xbf16>
    %28 = vector.shape_cast %27 : vector<1x12x128xbf16> to vector<12x128xbf16>
    %cst_18 = arith.constant dense<0.000000e+00> : vector<256x128xf32>
    %29 = tpu.matmul %26, %28, %cst_18 {dimension_numbers = #tpu.dot_dimension_numbers<[1], [0], [0], [1], [0, 0, 1, 1], [], []>} : vector<256x12xbf16>, vector<12x128xbf16>, vector<256x128xf32> -> vector<256x128xf32>
    %30 = arith.addf %21, %29 : vector<256x128xf32>
    %31 = vector.shape_cast %30 : vector<256x128xf32> to vector<16x16x128xf32>
    %32 = arith.truncf %31 : vector<16x16x128xf32> to vector<16x16x128xbf16>
    %c0_19 = arith.constant 0 : index
    %c0_20 = arith.constant 0 : index
    %c0_21 = arith.constant 0 : index
    %c0_22 = arith.constant 0 : index
    %33 = vector.load %arg5[%c0_19, %c0_20, %c0_21, %c0_22] : memref<1x16x16x128xbf16, #tpu.memory_space<vmem>>, vector<1x16x16x128xbf16>
    %34 = vector.shape_cast %33 : vector<1x16x16x128xbf16> to vector<16x16x128xbf16>
    %35 = vector.shape_cast %32 : vector<16x16x128xbf16> to vector<1x16x16x128xbf16>
    tpu.vector_store %arg5[%c0_19, %c0_20, %c0_21, %c0_22], %35 {strides = array<i32>} : memref<1x16x16x128xbf16, #tpu.memory_space<vmem>>, vector<1x16x16x128xbf16>,
    return
  }
  func.func @transform_0(%arg0: i32, %arg1: i32, %arg2: i32) -> (i32, i32, i32, i32) {
    %c0_i32 = arith.constant 0 : i32
    %c0_i32_0 = arith.constant 0 : i32
    %c0_i32_1 = arith.constant 0 : i32
    %c0_i32_2 = arith.constant 0 : i32
    return %arg0, %c0_i32, %c0_i32_0, %c0_i32_1 : i32, i32, i32, i32
  }
  func.func @transform_1(%arg0: i32, %arg1: i32, %arg2: i32) -> (i32, i32, i32) {
    %c0_i32 = arith.constant 0 : i32
    %c0_i32_0 = arith.constant 0 : i32
    %c0_i32_1 = arith.constant 0 : i32
    return %c0_i32, %c0_i32_0, %arg1 : i32, i32, i32
  }
  func.func @transform_2(%arg0: i32, %arg1: i32, %arg2: i32) -> (i32, i32, i32, i32) {
    %c0_i32 = arith.constant 0 : i32
    %c0_i32_0 = arith.constant 0 : i32
    return %arg0, %arg2, %c0_i32, %arg1 : i32, i32, i32, i32
  }
}

</mosaic_0001>

<llo_original>
// kernel: sparse_conv2d.1
$region0: #{sparse_conv2d.1}
  #allocation0 [shape = 'u32[]', space=smem, size = 0x4, offset = 0x4, fixed_abs, tag = 'smem constant byte address 0x4 - core index']
  #allocation1 [shape = 'u32[72,128]{1,0:T(1,128)}', space=vmem, size = 0x9000, scoped, tag = 'internal scratch']
  %s0 = inlined_call_operand.vmem [shape: bf16[2,18,16,12], index: 0, kind: input, shape index: {}]
  %s1 = inlined_call_operand.vmem [shape: bf16[3,12,128], index: 1, kind: input, shape index: {}]
  %s2 = inlined_call_operand.vmem [shape: bf16[2,16,16,128], index: 2, kind: output, shape index: {}]
  %s3 = sld [smem:[#allocation0]]
  $region41: #{sparse_conv2d.1} parent=0
    _
  %s5 = ssub.s32 1, %s3
  %s6 = scalar_select 0, %s5, %s3
  loop: start=0, step=1, limit=4
  $region2: #{sparse_conv2d.1} parent=0 // loop_pre_header
    _
  $region3: #{sparse_conv2d.1} parent=0 // loop_header
    %s8 = sphi 0, %s12
    %p9 = scmp.ge.s32.totalorder %s8, 4
    %s15 = sphi 0, %s34
    %s16 = sphi 0, %s30
    %s17 = sphi 0, %s26
    %s18 = sphi 0, %s15
    %s19 = sphi 0, %s16
    %s20 = sphi 0, %s17
    %s21 = sphi 0, %s18
    %s22 = sphi 0, %s19
    %s23 = sphi 0, %s20
    %s37 = sphi 0, %s39
    %s40 = sphi 0, %s37
    %s41 = sphi 0, %s40
    %s57 = sphi 0, %s41
    %s63 = sphi 0, %s65
    %s66 = sphi 0, %s63
    %s67 = sphi 0, %s66
    %s83 = sphi 0, %s67
    %s93 = sphi 0, %s95
    %s96 = sphi 0, %s93
    %s97 = sphi 0, %s96
    %s113 = sphi 0, %s97
  $region4: #{sparse_conv2d.1} parent=0 // loop_header_branch
    %11 = sbr.rel (%p9) target = $region8
  $region5: #{sparse_conv2d.1} parent=0 // loop_body
    %s13 = ssub.s32 %s8, 1
    %s14 = ssub.s32 %s8, 2
    %s24 = sadd.s32 1, %s17
    %p25 = scmp.ge.s32.totalorder %s24, 1
    %s26 = scalar_select %p25, 0, %s24
    %s27 = sadd.s32 1, %s16
    %s28 = scalar_select %p25, %s27, %s16
    %p29 = scmp.ge.s32.totalorder %s28, 1
    %s30 = scalar_select %p29, 0, %s28
    %s31 = sadd.s32 1, %s15
    %s32 = scalar_select %p29, %s31, %s15
    %p33 = scmp.ge.s32.totalorder %s32, 2
    %s34 = scalar_select %p33, 0, %s32
    %s35 = ssub.s32 %s15, %s34
    %p36 = scmp.eq.s32.totalorder %s35, 0
    %s38 = sadd.s32 %s37, 1
    %s39 = scalar_select %p36, %s37, %s38
    %p42 = pneg %p36
    %p43 = scmp.eq.s32.totalorder %s8, 1
    %p44 = por %p42, %p43
    %p45 = scmp.ne.s32.totalorder %s37, %s40
    %p46 = scmp.eq.s32.totalorder %s8, 0
    %p47 = por %p45, %p46
    %p48 = scmp.ne.s32.totalorder %s37, %s40
    %p49 = scmp.eq.s32.totalorder %s13, 1
    %p50 = por %p48, %p49
    %p51 = scmp.ne.s32.totalorder %s40, %s41
    %p52 = scmp.eq.s32.totalorder %s13, 0
    %p53 = por %p51, %p52
    %p54 = scmp.ne.s32.totalorder %s40, %s41
    %p55 = scmp.eq.s32.totalorder %s14, 1
    %p56 = por %p54, %p55
    %p58 = scmp.ne.s32.totalorder %s41, %s57
    %p59 = scmp.eq.s32.totalorder %s14, 0
    %p60 = por %p58, %p59
    %s61 = ssub.s32 %s16, %s30
    %p62 = scmp.eq.s32.totalorder %s61, 0
    %s64 = sadd.s32 %s63, 1
    %s65 = scalar_select %p62, %s63, %s64
    %p68 = pneg %p62
    %p69 = scmp.eq.s32.totalorder %s8, 1
    %p70 = por %p68, %p69
    %p71 = scmp.ne.s32.totalorder %s63, %s66
    %p72 = scmp.eq.s32.totalorder %s8, 0
    %p73 = por %p71, %p72
    %p74 = scmp.ne.s32.totalorder %s63, %s66
    %p75 = scmp.eq.s32.totalorder %s13, 1
    %p76 = por %p74, %p75
    %p77 = scmp.ne.s32.totalorder %s66, %s67
    %p78 = scmp.eq.s32.totalorder %s13, 0
    %p79 = por %p77, %p78
    %p80 = scmp.ne.s32.totalorder %s66, %s67
    %p81 = scmp.eq.s32.totalorder %s14, 1
    %p82 = por %p80, %p81
    %p84 = scmp.ne.s32.totalorder %s67, %s83
    %p85 = scmp.eq.s32.totalorder %s14, 0
    %p86 = por %p84, %p85
    %s87 = ssub.s32 %s15, %s34
    %s88 = ssub.s32 %s17, %s26
    %s89 = sor.u32 %s87, %s88
    %s90 = ssub.s32 %s16, %s30
    %s91 = sor.u32 %s89, %s90
    %p92 = scmp.eq.s32.totalorder %s91, 0
    %s94 = sadd.s32 %s93, 1
    %s95 = scalar_select %p92, %s93, %s94
    %p98 = pneg %p92
    %p99 = scmp.eq.s32.totalorder %s8, 1
    %p100 = por %p98, %p99
    %p101 = scmp.ne.s32.totalorder %s93, %s96
    %p102 = scmp.eq.s32.totalorder %s8, 0
    %p103 = por %p101, %p102
    %p104 = scmp.ne.s32.totalorder %s93, %s96
    %p105 = scmp.eq.s32.totalorder %s13, 1
    %p106 = por %p104, %p105
    %p107 = scmp.ne.s32.totalorder %s96, %s97
    %p108 = scmp.eq.s32.totalorder %s13, 0
    %p109 = por %p107, %p108
    %p110 = scmp.ne.s32.totalorder %s96, %s97
    %p111 = scmp.eq.s32.totalorder %s14, 1
    %p112 = por %p110, %p111
    %p114 = scmp.ne.s32.totalorder %s97, %s113
    %p115 = scmp.eq.s32.totalorder %s14, 0
    %p116 = por %p114, %p115
    %p117 = scmp.le.s32.totalorder 1, %s8
    %p118 = scmp.lt.s32.totalorder %s8, 3
    %p119 = pnand %p117, %p118
    %p120 = pneg %p119
    // Predicated region
    $region9: #{sparse_conv2d.1} parent=5 // pred_check
      _
    $region10: #{sparse_conv2d.1} parent=5 // pred_check_branch
      %122 = sbr.rel (%p119) target = $region12
    $region11: #{sparse_conv2d.1} parent=5 // pred_region
      %s123 = ssub.s32 %s8, 1
      // Predicated region
      $region13: #{sparse_conv2d.1} parent=11 // pred_check
        %p124 = pneg %p79
      $region14: #{sparse_conv2d.1} parent=11 // pred_check_branch
        %126 = sbr.rel (%p124) target = $region16
      $region15: #{sparse_conv2d.1} parent=11 // pred_region
        %p127 = scmp.lt.s32.totalorder %s19, 0
        %s128 = scalar_select %p127, %s19, 0
        %s129 = smul.addr %s128, 4
        %s130 = scalar_lea.vmem %s1, %s129
      $region16: #{sparse_conv2d.1} parent=11 // pred_fallthru
        _
    $region12: #{sparse_conv2d.1} parent=5 // pred_fallthru
      _
    %p131 = scmp.lt.s32.totalorder %s8, 2
    // Predicated region
    $region17: #{sparse_conv2d.1} parent=5 // pred_check
      %p132 = pneg %p131
    $region18: #{sparse_conv2d.1} parent=5 // pred_check_branch
      %134 = sbr.rel (%p132) target = $region20
    $region19: #{sparse_conv2d.1} parent=5 // pred_region
      // Predicated region
      $region21: #{sparse_conv2d.1} parent=19 // pred_check
        %p135 = pneg %p47
      $region22: #{sparse_conv2d.1} parent=19 // pred_check_branch
        %137 = sbr.rel (%p135) target = $region24
      $region23: #{sparse_conv2d.1} parent=19 // pred_region
        %p138 = scmp.lt.s32.totalorder %s15, 1
        %s139 = scalar_select %p138, %s15, 1
        %s140 = smul.addr %s139, 36
        %s141 = smul.addr %s140, 4
        %s142 = scalar_lea.vmem %s0, %s141
      $region24: #{sparse_conv2d.1} parent=19 // pred_fallthru
        _
    $region20: #{sparse_conv2d.1} parent=5 // pred_fallthru
      _
    %p143 = scmp.le.s32.totalorder 1, %s8
    %p144 = scmp.lt.s32.totalorder %s8, 3
    %p145 = pnand %p143, %p144
    %p146 = pneg %p145
    // Predicated region
    $region25: #{sparse_conv2d.1} parent=5 // pred_check
      _
    $region26: #{sparse_conv2d.1} parent=5 // pred_check_branch
      %148 = sbr.rel (%p145) target = $region28
    $region27: #{sparse_conv2d.1} parent=5 // pred_region
      %s149 = ssub.s32 %s8, 1
      %p150 = scmp.lt.s32.totalorder %s18, 1
      %s151 = scalar_select %p150, %s18, 1
      %s152 = smul.addr %s151, 36
      %s153 = smul.addr %s152, 4
      %s154 = scalar_lea.vmem %s0, %s153
      %p155 = pneg %p53
      %p156 = pneg %p50
      %p157 = scmp.lt.s32.totalorder %s19, 0
      %s158 = scalar_select %p157, %s19, 0
      %s159 = smul.addr %s158, 4
      %s160 = scalar_lea.vmem %s1, %s159
      %p161 = pneg %p79
      %p162 = pneg %p76
      %p163 = pneg %p109
      %p164 = pneg %p106
      %s165 = smul.u32 16, %s20
      %p166 = scmp.lt.s32.totalorder %s18, 1
      %s167 = scalar_select %p166, %s18, 1
      %p168 = scmp.lt.s32.totalorder %s165, 15
      %s169 = scalar_select %p168, %s165, 15
      %p170 = scmp.lt.s32.totalorder %s19, 0
      %s171 = scalar_select %p170, %s19, 0
      %s172 = smul.addr %s169, 2
      %s173 = sadd.s32 %s171, %s172
      %s174 = smul.addr %s167, 32
      %s175 = sadd.s32 %s173, %s174
      %s176 = smul.addr %s175, 4
      %s177 = scalar_lea.vmem %s2, %s176
      %p178 = scmp.lt.s32.totalorder %s18, 1
      %s179 = scalar_select %p178, %s18, 1
      %s180 = smul.addr %s179, 36
      %s181 = smul.addr %s180, 4
      %s182 = scalar_lea.vmem %s0, %s181
      %p183 = scmp.lt.s32.totalorder %s19, 0
      %s184 = scalar_select %p183, %s19, 0
      %s185 = smul.addr %s184, 4
      %s186 = scalar_lea.vmem %s1, %s185
      %s187 = smul.u32 16, %s20
      %p188 = scmp.lt.s32.totalorder %s18, 1
      %s189 = scalar_select %p188, %s18, 1
      %p190 = scmp.lt.s32.totalorder %s187, 15
      %s191 = scalar_select %p190, %s187, 15
      %p192 = scmp.lt.s32.totalorder %s19, 0
      %s193 = scalar_select %p192, %s19, 0
      %s194 = smul.addr %s191, 2
      %s195 = sadd.s32 %s193, %s194
      %s196 = smul.addr %s189, 32
      %s197 = sadd.s32 %s195, %s196
      %s198 = smul.addr %s197, 4
      %s199 = scalar_lea.vmem %s2, %s198
      %s200 = smul.u32 16, %s20
      %s202 = smul.u32 %s20, 16
      %s203 = smul.u32 %s202, 2
      %s204 = smul.addr %s203, 4
      %s205 = scalar_lea.vmem %s182, %s204
      %v206 = vld [vmem:[%s205] sm:$0xf]
      %v207 = vld [vmem:[%s205 + $0x4] sm:$0xf]
      %v208 = vld [vmem:[%s205 + $0x8] sm:$0xf]
      %v209 = vld [vmem:[%s205 + $0xc] sm:$0xf]
      %v210 = vld [vmem:[%s205 + $0x10] sm:$0xf]
      %v211 = vld [vmem:[%s205 + $0x14] sm:$0xf]
      %v212 = vld [vmem:[%s205 + $0x18] sm:$0xf]
      %v213 = vld [vmem:[%s205 + $0x1c] sm:$0xf]
      %v214 = vld [vmem:[%s205 + $0x20] sm:$0xf]
      %v215 = vld [vmem:[%s205 + $0x24] sm:$0xf]
      %v216 = vld [vmem:[%s205 + $0x28] sm:$0xf]
      %v217 = vld [vmem:[%s205 + $0x2c] sm:$0xf]
      %v218 = vld [vmem:[%s205 + $0x30] sm:$0xf]
      %v219 = vld [vmem:[%s205 + $0x34] sm:$0xf]
      %v220 = vld [vmem:[%s205 + $0x38] sm:$0xf]
      %v221 = vld [vmem:[%s205 + $0x3c] sm:$0xf]
      %v222 = vld [vmem:[%s205 + $0x40] sm:$0xf]
      %v223 = vld [vmem:[%s205 + $0x44] sm:$0xf]
      %v224 = vld [vmem:[%s205 + $0x48] sm:$0xf]
      %v225 = vld [vmem:[%s205 + $0x4c] sm:$0xf]
      %v226 = vld [vmem:[%s205 + $0x50] sm:$0xf]
      %v227 = vld [vmem:[%s205 + $0x54] sm:$0xf]
      %v228 = vld [vmem:[%s205 + $0x58] sm:$0xf]
      %v229 = vld [vmem:[%s205 + $0x5c] sm:$0xf]
      %v230 = vld [vmem:[%s205 + $0x60] sm:$0xf]
      %v231 = vld [vmem:[%s205 + $0x64] sm:$0xf]
      %v232 = vld [vmem:[%s205 + $0x68] sm:$0xf]
      %v233 = vld [vmem:[%s205 + $0x6c] sm:$0xf]
      %v234 = vld [vmem:[%s205 + $0x70] sm:$0xf]
      %v235 = vld [vmem:[%s205 + $0x74] sm:$0xf]
      %v236 = vld [vmem:[%s205 + $0x78] sm:$0xf]
      %v237 = vld [vmem:[%s205 + $0x7c] sm:$0xf]
      %v238 = vld [vmem:[%s186] sm:$0xf]
      %v239 = vld [vmem:[%s186 + $0x4] sm:$0x3]
      %s240 = sadd.s32 %s202, 1
      %s241 = smul.u32 %s240, 2
      %s242 = smul.addr %s241, 4
      %s243 = scalar_lea.vmem %s182, %s242
      %v244 = vld [vmem:[%s243] sm:$0xf]
      %v245 = vld [vmem:[%s243 + $0x4] sm:$0xf]
      %v246 = vld [vmem:[%s243 + $0x8] sm:$0xf]
      %v247 = vld [vmem:[%s243 + $0xc] sm:$0xf]
      %v248 = vld [vmem:[%s243 + $0x10] sm:$0xf]
      %v249 = vld [vmem:[%s243 + $0x14] sm:$0xf]
      %v250 = vld [vmem:[%s243 + $0x18] sm:$0xf]
      %v251 = vld [vmem:[%s243 + $0x1c] sm:$0xf]
      %v252 = vld [vmem:[%s243 + $0x20] sm:$0xf]
      %v253 = vld [vmem:[%s243 + $0x24] sm:$0xf]
      %v254 = vld [vmem:[%s243 + $0x28] sm:$0xf]
      %v255 = vld [vmem:[%s243 + $0x2c] sm:$0xf]
      %v256 = vld [vmem:[%s243 + $0x30] sm:$0xf]
      %v257 = vld [vmem:[%s243 + $0x34] sm:$0xf]
      %v258 = vld [vmem:[%s243 + $0x38] sm:$0xf]
      %v259 = vld [vmem:[%s243 + $0x3c] sm:$0xf]
      %v260 = vld [vmem:[%s243 + $0x40] sm:$0xf]
      %v261 = vld [vmem:[%s243 + $0x44] sm:$0xf]
      %v262 = vld [vmem:[%s243 + $0x48] sm:$0xf]
      %v263 = vld [vmem:[%s243 + $0x4c] sm:$0xf]
      %v264 = vld [vmem:[%s243 + $0x50] sm:$0xf]
      %v265 = vld [vmem:[%s243 + $0x54] sm:$0xf]
      %v266 = vld [vmem:[%s243 + $0x58] sm:$0xf]
      %v267 = vld [vmem:[%s243 + $0x5c] sm:$0xf]
      %v268 = vld [vmem:[%s243 + $0x60] sm:$0xf]
      %v269 = vld [vmem:[%s243 + $0x64] sm:$0xf]
      %v270 = vld [vmem:[%s243 + $0x68] sm:$0xf]
      %v271 = vld [vmem:[%s243 + $0x6c] sm:$0xf]
      %v272 = vld [vmem:[%s243 + $0x70] sm:$0xf]
      %v273 = vld [vmem:[%s243 + $0x74] sm:$0xf]
      %v274 = vld [vmem:[%s243 + $0x78] sm:$0xf]
      %v275 = vld [vmem:[%s243 + $0x7c] sm:$0xf]
      %s276 = scalar_lea.vmem %s186, 8
      %v277 = vld [vmem:[%s276] sm:$0xf]
      %v278 = vld [vmem:[%s276 + $0x4] sm:$0x3]
      %v311 = vunpack.c.l.b16 %v244
      %v312 = vunpack.c.l.b16 %v245
      %v313 = vunpack.c.l.b16 %v246
      %v314 = vunpack.c.l.b16 %v247
      %v315 = vunpack.c.l.b16 %v248
      %v316 = vunpack.c.l.b16 %v249
      %v317 = vunpack.c.l.b16 %v250
      %v318 = vunpack.c.l.b16 %v251
      %v319 = vunpack.c.l.b16 %v252
      %v320 = vunpack.c.l.b16 %v253
      %v321 = vunpack.c.l.b16 %v254
      %v322 = vunpack.c.l.b16 %v255
      %v323 = vunpack.c.l.b16 %v256
      %v324 = vunpack.c.l.b16 %v257
      %v325 = vunpack.c.l.b16 %v258
      %v326 = vunpack.c.l.b16 %v259
      %v327 = vunpack.c.l.b16 %v260
      %v328 = vunpack.c.l.b16 %v261
      %v329 = vunpack.c.l.b16 %v262
      %v330 = vunpack.c.l.b16 %v263
      %v331 = vunpack.c.l.b16 %v264
      %v332 = vunpack.c.l.b16 %v265
      %v333 = vunpack.c.l.b16 %v266
      %v334 = vunpack.c.l.b16 %v267
      %v335 = vunpack.c.l.b16 %v268
      %v336 = vunpack.c.l.b16 %v269
      %v337 = vunpack.c.l.b16 %v270
      %v338 = vunpack.c.l.b16 %v271
      %v339 = vunpack.c.l.b16 %v272
      %v340 = vunpack.c.l.b16 %v273
      %v341 = vunpack.c.l.b16 %v274
      %v342 = vunpack.c.l.b16 %v275
      %v343 = vpack.c.b16 %v312, %v311
      %v344 = vpack.c.b16 %v314, %v313
      %v345 = vpack.c.b16 %v316, %v315
      %v346 = vpack.c.b16 %v318, %v317
      %v347 = vpack.c.b16 %v320, %v319
      %v348 = vpack.c.b16 %v322, %v321
      %v349 = vpack.c.b16 %v324, %v323
      %v350 = vpack.c.b16 %v326, %v325
      %v351 = vpack.c.b16 %v328, %v327
      %v352 = vpack.c.b16 %v330, %v329
      %v353 = vpack.c.b16 %v332, %v331
      %v354 = vpack.c.b16 %v334, %v333
      %v355 = vpack.c.b16 %v336, %v335
      %v356 = vpack.c.b16 %v338, %v337
      %v357 = vpack.c.b16 %v340, %v339
      %v358 = vpack.c.b16 %v342, %v341
      %v361 = vunpack.c.l.b16 %v277
      %v362 = vunpack.c.l.b16 %v278
      %v363 = vpack.c.b16 %v362, %v361
      %vm364 = vcmask 97280
      %v366 = vsel %vm364, %v343, 0
      %v369 = vsel %vm364, %v344, 0
      %v372 = vsel %vm364, %v345, 0
      %v375 = vsel %vm364, %v346, 0
      %v378 = vsel %vm364, %v347, 0
      %v381 = vsel %vm364, %v348, 0
      %v384 = vsel %vm364, %v349, 0
      %v387 = vsel %vm364, %v350, 0
      %v390 = vsel %vm364, %v351, 0
      %v393 = vsel %vm364, %v352, 0
      %v396 = vsel %vm364, %v353, 0
      %v399 = vsel %vm364, %v354, 0
      %v402 = vsel %vm364, %v355, 0
      %v405 = vsel %vm364, %v356, 0
      %v408 = vsel %vm364, %v357, 0
      %v411 = vsel %vm364, %v358, 0
      %vm413 = vcmask 1045504
      %v415 = vsel %vm413, %v363, 0
      %417 = vmatpush.bf16.msra.mxu0 0
      %418 = vmatpush.bf16.msra.mxu0 0
      %419 = vmatpush.bf16.msra.mxu0 0
      %420 = vmatpush.bf16.msra.mxu0 0
      %421 = vmatpush.bf16.msra.mxu0 0
      %422 = vmatpush.bf16.msra.mxu0 0
      %423 = vmatpush.bf16.msra.mxu0 0
      %424 = vmatpush.bf16.msra.mxu0 %v415
      %425 = vmatmul.bf16.gmra.mxu0 %v366
      %v426 = vpop.f32.mrf.mxu0
      %v427 = vadd.f32 0.0, %v426
      %v428 = vpop.f32.mrf.mxu0
      %v429 = vadd.f32 0.0, %v428
      %430 = vmatmul.bf16.gmra.mxu0 %v369
      %v431 = vpop.f32.mrf.mxu0
      %v432 = vadd.f32 0.0, %v431
      %v433 = vpop.f32.mrf.mxu0
      %v434 = vadd.f32 0.0, %v433
      %435 = vmatmul.bf16.gmra.mxu0 %v372
      %v436 = vpop.f32.mrf.mxu0
      %v437 = vadd.f32 0.0, %v436
      %v438 = vpop.f32.mrf.mxu0
      %v439 = vadd.f32 0.0, %v438
      %440 = vmatmul.bf16.gmra.mxu0 %v375
      %v441 = vpop.f32.mrf.mxu0
      %v442 = vadd.f32 0.0, %v441
      %v443 = vpop.f32.mrf.mxu0
      %v444 = vadd.f32 0.0, %v443
      %445 = vmatmul.bf16.gmra.mxu0 %v378
      %v446 = vpop.f32.mrf.mxu0
      %v447 = vadd.f32 0.0, %v446
      %v448 = vpop.f32.mrf.mxu0
      %v449 = vadd.f32 0.0, %v448
      %450 = vmatmul.bf16.gmra.mxu0 %v381
      %v451 = vpop.f32.mrf.mxu0
      %v452 = vadd.f32 0.0, %v451
      %v453 = vpop.f32.mrf.mxu0
      %v454 = vadd.f32 0.0, %v453
      %455 = vmatmul.bf16.gmra.mxu0 %v384
      %v456 = vpop.f32.mrf.mxu0
      %v457 = vadd.f32 0.0, %v456
      %v458 = vpop.f32.mrf.mxu0
      %v459 = vadd.f32 0.0, %v458
      %460 = vmatmul.bf16.gmra.mxu0 %v387
      %v461 = vpop.f32.mrf.mxu0
      %v462 = vadd.f32 0.0, %v461
      %v463 = vpop.f32.mrf.mxu0
      %v464 = vadd.f32 0.0, %v463
      %465 = vmatmul.bf16.gmra.mxu0 %v390
      %v466 = vpop.f32.mrf.mxu0
      %v467 = vadd.f32 0.0, %v466
      %v468 = vpop.f32.mrf.mxu0
      %v469 = vadd.f32 0.0, %v468
      %470 = vmatmul.bf16.gmra.mxu0 %v393
      %v471 = vpop.f32.mrf.mxu0
      %v472 = vadd.f32 0.0, %v471
      %v473 = vpop.f32.mrf.mxu0
      %v474 = vadd.f32 0.0, %v473
      %475 = vmatmul.bf16.gmra.mxu0 %v396
      %v476 = vpop.f32.mrf.mxu0
      %v477 = vadd.f32 0.0, %v476
      %v478 = vpop.f32.mrf.mxu0
      %v479 = vadd.f32 0.0, %v478
      %480 = vmatmul.bf16.gmra.mxu0 %v399
      %v481 = vpop.f32.mrf.mxu0
      %v482 = vadd.f32 0.0, %v481
      %v483 = vpop.f32.mrf.mxu0
      %v484 = vadd.f32 0.0, %v483
      %485 = vmatmul.bf16.gmra.mxu0 %v402
      %v486 = vpop.f32.mrf.mxu0
      %v487 = vadd.f32 0.0, %v486
      %v488 = vpop.f32.mrf.mxu0
      %v489 = vadd.f32 0.0, %v488
      %490 = vmatmul.bf16.gmra.mxu0 %v405
      %v491 = vpop.f32.mrf.mxu0
      %v492 = vadd.f32 0.0, %v491
      %v493 = vpop.f32.mrf.mxu0
      %v494 = vadd.f32 0.0, %v493
      %495 = vmatmul.bf16.gmra.mxu0 %v408
      %v496 = vpop.f32.mrf.mxu0
      %v497 = vadd.f32 0.0, %v496
      %v498 = vpop.f32.mrf.mxu0
      %v499 = vadd.f32 0.0, %v498
      %500 = vmatmul.bf16.gmra.mxu0 %v411
      %v501 = vpop.f32.mrf.mxu0
      %v502 = vadd.f32 0.0, %v501
      %v503 = vpop.f32.mrf.mxu0
      %v504 = vadd.f32 0.0, %v503
      %505 = vdwg.mxu0
      %v538 = vunpack.c.l.b16 %v206
      %v539 = vunpack.c.l.b16 %v207
      %v540 = vunpack.c.l.b16 %v208
      %v541 = vunpack.c.l.b16 %v209
      %v542 = vunpack.c.l.b16 %v210
      %v543 = vunpack.c.l.b16 %v211
      %v544 = vunpack.c.l.b16 %v212
      %v545 = vunpack.c.l.b16 %v213
      %v546 = vunpack.c.l.b16 %v214
      %v547 = vunpack.c.l.b16 %v215
      %v548 = vunpack.c.l.b16 %v216
      %v549 = vunpack.c.l.b16 %v217
      %v550 = vunpack.c.l.b16 %v218
      %v551 = vunpack.c.l.b16 %v219
      %v552 = vunpack.c.l.b16 %v220
      %v553 = vunpack.c.l.b16 %v221
      %v554 = vunpack.c.l.b16 %v222
      %v555 = vunpack.c.l.b16 %v223
      %v556 = vunpack.c.l.b16 %v224
      %v557 = vunpack.c.l.b16 %v225
      %v558 = vunpack.c.l.b16 %v226
      %v559 = vunpack.c.l.b16 %v227
      %v560 = vunpack.c.l.b16 %v228
      %v561 = vunpack.c.l.b16 %v229
      %v562 = vunpack.c.l.b16 %v230
      %v563 = vunpack.c.l.b16 %v231
      %v564 = vunpack.c.l.b16 %v232
      %v565 = vunpack.c.l.b16 %v233
      %v566 = vunpack.c.l.b16 %v234
      %v567 = vunpack.c.l.b16 %v235
      %v568 = vunpack.c.l.b16 %v236
      %v569 = vunpack.c.l.b16 %v237
      %v570 = vpack.c.b16 %v539, %v538
      %v571 = vpack.c.b16 %v541, %v540
      %v572 = vpack.c.b16 %v543, %v542
      %v573 = vpack.c.b16 %v545, %v544
      %v574 = vpack.c.b16 %v547, %v546
      %v575 = vpack.c.b16 %v549, %v548
      %v576 = vpack.c.b16 %v551, %v550
      %v577 = vpack.c.b16 %v553, %v552
      %v578 = vpack.c.b16 %v555, %v554
      %v579 = vpack.c.b16 %v557, %v556
      %v580 = vpack.c.b16 %v559, %v558
      %v581 = vpack.c.b16 %v561, %v560
      %v582 = vpack.c.b16 %v563, %v562
      %v583 = vpack.c.b16 %v565, %v564
      %v584 = vpack.c.b16 %v567, %v566
      %v585 = vpack.c.b16 %v569, %v568
      %v588 = vunpack.c.l.b16 %v238
      %v589 = vunpack.c.l.b16 %v239
      %v590 = vpack.c.b16 %v589, %v588
      %v592 = vsel %vm364, %v570, 0
      %v595 = vsel %vm364, %v571, 0
      %v598 = vsel %vm364, %v572, 0
      %v601 = vsel %vm364, %v573, 0
      %v604 = vsel %vm364, %v574, 0
      %v607 = vsel %vm364, %v575, 0
      %v610 = vsel %vm364, %v576, 0
      %v613 = vsel %vm364, %v577, 0
      %v616 = vsel %vm364, %v578, 0
      %v619 = vsel %vm364, %v579, 0
      %v622 = vsel %vm364, %v580, 0
      %v625 = vsel %vm364, %v581, 0
      %v628 = vsel %vm364, %v582, 0
      %v631 = vsel %vm364, %v583, 0
      %v634 = vsel %vm364, %v584, 0
      %v637 = vsel %vm364, %v585, 0
      %v640 = vsel %vm413, %v590, 0
      %642 = vmatpush.bf16.msra.mxu0 0
      %643 = vmatpush.bf16.msra.mxu0 0
      %644 = vmatpush.bf16.msra.mxu0 0
      %645 = vmatpush.bf16.msra.mxu0 0
      %646 = vmatpush.bf16.msra.mxu0 0
      %647 = vmatpush.bf16.msra.mxu0 0
      %648 = vmatpush.bf16.msra.mxu0 0
      %649 = vmatpush.bf16.msra.mxu0 %v640
      %650 = vmatmul.bf16.gmra.mxu0 %v592
      %v651 = vpop.f32.mrf.mxu0
      %v652 = vadd.f32 %v427, %v651
      %v653 = vpop.f32.mrf.mxu0
      %v654 = vadd.f32 %v429, %v653
      %655 = vmatmul.bf16.gmra.mxu0 %v595
      %v656 = vpop.f32.mrf.mxu0
      %v657 = vadd.f32 %v432, %v656
      %v658 = vpop.f32.mrf.mxu0
      %v659 = vadd.f32 %v434, %v658
      %660 = vmatmul.bf16.gmra.mxu0 %v598
      %v661 = vpop.f32.mrf.mxu0
      %v662 = vadd.f32 %v437, %v661
      %v663 = vpop.f32.mrf.mxu0
      %v664 = vadd.f32 %v439, %v663
      %665 = vmatmul.bf16.gmra.mxu0 %v601
      %v666 = vpop.f32.mrf.mxu0
      %v667 = vadd.f32 %v442, %v666
      %v668 = vpop.f32.mrf.mxu0
      %v669 = vadd.f32 %v444, %v668
      %670 = vmatmul.bf16.gmra.mxu0 %v604
      %v671 = vpop.f32.mrf.mxu0
      %v672 = vadd.f32 %v447, %v671
      %v673 = vpop.f32.mrf.mxu0
      %v674 = vadd.f32 %v449, %v673
      %675 = vmatmul.bf16.gmra.mxu0 %v607
      %v676 = vpop.f32.mrf.mxu0
      %v677 = vadd.f32 %v452, %v676
      %v678 = vpop.f32.mrf.mxu0
      %v679 = vadd.f32 %v454, %v678
      %680 = vmatmul.bf16.gmra.mxu0 %v610
      %v681 = vpop.f32.mrf.mxu0
      %v682 = vadd.f32 %v457, %v681
      %v683 = vpop.f32.mrf.mxu0
      %v684 = vadd.f32 %v459, %v683
      %685 = vmatmul.bf16.gmra.mxu0 %v613
      %v686 = vpop.f32.mrf.mxu0
      %v687 = vadd.f32 %v462, %v686
      %v688 = vpop.f32.mrf.mxu0
      %v689 = vadd.f32 %v464, %v688
      %690 = vmatmul.bf16.gmra.mxu0 %v616
      %v691 = vpop.f32.mrf.mxu0
      %v692 = vadd.f32 %v467, %v691
      %v693 = vpop.f32.mrf.mxu0
      %v694 = vadd.f32 %v469, %v693
      %695 = vmatmul.bf16.gmra.mxu0 %v619
      %v696 = vpop.f32.mrf.mxu0
      %v697 = vadd.f32 %v472, %v696
      %v698 = vpop.f32.mrf.mxu0
      %v699 = vadd.f32 %v474, %v698
      %700 = vmatmul.bf16.gmra.mxu0 %v622
      %v701 = vpop.f32.mrf.mxu0
      %v702 = vadd.f32 %v477, %v701
      %v703 = vpop.f32.mrf.mxu0
      %v704 = vadd.f32 %v479, %v703
      %705 = vmatmul.bf16.gmra.mxu0 %v625
      %v706 = vpop.f32.mrf.mxu0
      %v707 = vadd.f32 %v482, %v706
      %v708 = vpop.f32.mrf.mxu0
      %v709 = vadd.f32 %v484, %v708
      %710 = vmatmul.bf16.gmra.mxu0 %v628
      %v711 = vpop.f32.mrf.mxu0
      %v712 = vadd.f32 %v487, %v711
      %v713 = vpop.f32.mrf.mxu0
      %v714 = vadd.f32 %v489, %v713
      %715 = vmatmul.bf16.gmra.mxu0 %v631
      %v716 = vpop.f32.mrf.mxu0
      %v717 = vadd.f32 %v492, %v716
      %v718 = vpop.f32.mrf.mxu0
      %v719 = vadd.f32 %v494, %v718
      %720 = vmatmul.bf16.gmra.mxu0 %v634
      %v721 = vpop.f32.mrf.mxu0
      %v722 = vadd.f32 %v497, %v721
      %v723 = vpop.f32.mrf.mxu0
      %v724 = vadd.f32 %v499, %v723
      %725 = vmatmul.bf16.gmra.mxu0 %v637
      %v726 = vpop.f32.mrf.mxu0
      %v727 = vadd.f32 %v502, %v726
      %v728 = vpop.f32.mrf.mxu0
      %v729 = vadd.f32 %v504, %v728
      %730 = vdwg.mxu0
      %s731 = sadd.s32 %s202, 2
      %s732 = smul.u32 %s731, 2
      %s733 = smul.addr %s732, 4
      %s734 = scalar_lea.vmem %s182, %s733
      %v735 = vld [vmem:[%s734] sm:$0xf]
      %v736 = vld [vmem:[%s734 + $0x4] sm:$0xf]
      %v737 = vld [vmem:[%s734 + $0x8] sm:$0xf]
      %v738 = vld [vmem:[%s734 + $0xc] sm:$0xf]
      %v739 = vld [vmem:[%s734 + $0x10] sm:$0xf]
      %v740 = vld [vmem:[%s734 + $0x14] sm:$0xf]
      %v741 = vld [vmem:[%s734 + $0x18] sm:$0xf]
      %v742 = vld [vmem:[%s734 + $0x1c] sm:$0xf]
      %v743 = vld [vmem:[%s734 + $0x20] sm:$0xf]
      %v744 = vld [vmem:[%s734 + $0x24] sm:$0xf]
      %v745 = vld [vmem:[%s734 + $0x28] sm:$0xf]
      %v746 = vld [vmem:[%s734 + $0x2c] sm:$0xf]
      %v747 = vld [vmem:[%s734 + $0x30] sm:$0xf]
      %v748 = vld [vmem:[%s734 + $0x34] sm:$0xf]
      %v749 = vld [vmem:[%s734 + $0x38] sm:$0xf]
      %v750 = vld [vmem:[%s734 + $0x3c] sm:$0xf]
      %v751 = vld [vmem:[%s734 + $0x40] sm:$0xf]
      %v752 = vld [vmem:[%s734 + $0x44] sm:$0xf]
      %v753 = vld [vmem:[%s734 + $0x48] sm:$0xf]
      %v754 = vld [vmem:[%s734 + $0x4c] sm:$0xf]
      %v755 = vld [vmem:[%s734 + $0x50] sm:$0xf]
      %v756 = vld [vmem:[%s734 + $0x54] sm:$0xf]
      %v757 = vld [vmem:[%s734 + $0x58] sm:$0xf]
      %v758 = vld [vmem:[%s734 + $0x5c] sm:$0xf]
      %v759 = vld [vmem:[%s734 + $0x60] sm:$0xf]
      %v760 = vld [vmem:[%s734 + $0x64] sm:$0xf]
      %v761 = vld [vmem:[%s734 + $0x68] sm:$0xf]
      %v762 = vld [vmem:[%s734 + $0x6c] sm:$0xf]
      %v763 = vld [vmem:[%s734 + $0x70] sm:$0xf]
      %v764 = vld [vmem:[%s734 + $0x74] sm:$0xf]
      %v765 = vld [vmem:[%s734 + $0x78] sm:$0xf]
      %v766 = vld [vmem:[%s734 + $0x7c] sm:$0xf]
      %s767 = scalar_lea.vmem %s186, 16
      %v768 = vld [vmem:[%s767] sm:$0xf]
      %v769 = vld [vmem:[%s767 + $0x4] sm:$0x3]
      %v802 = vunpack.c.l.b16 %v735
      %v803 = vunpack.c.l.b16 %v736
      %v804 = vunpack.c.l.b16 %v737
      %v805 = vunpack.c.l.b16 %v738
      %v806 = vunpack.c.l.b16 %v739
      %v807 = vunpack.c.l.b16 %v740
      %v808 = vunpack.c.l.b16 %v741
      %v809 = vunpack.c.l.b16 %v742
      %v810 = vunpack.c.l.b16 %v743
      %v811 = vunpack.c.l.b16 %v744
      %v812 = vunpack.c.l.b16 %v745
      %v813 = vunpack.c.l.b16 %v746
      %v814 = vunpack.c.l.b16 %v747
      %v815 = vunpack.c.l.b16 %v748
      %v816 = vunpack.c.l.b16 %v749
      %v817 = vunpack.c.l.b16 %v750
      %v818 = vunpack.c.l.b16 %v751
      %v819 = vunpack.c.l.b16 %v752
      %v820 = vunpack.c.l.b16 %v753
      %v821 = vunpack.c.l.b16 %v754
      %v822 = vunpack.c.l.b16 %v755
      %v823 = vunpack.c.l.b16 %v756
      %v824 = vunpack.c.l.b16 %v757
      %v825 = vunpack.c.l.b16 %v758
      %v826 = vunpack.c.l.b16 %v759
      %v827 = vunpack.c.l.b16 %v760
      %v828 = vunpack.c.l.b16 %v761
      %v829 = vunpack.c.l.b16 %v762
      %v830 = vunpack.c.l.b16 %v763
      %v831 = vunpack.c.l.b16 %v764
      %v832 = vunpack.c.l.b16 %v765
      %v833 = vunpack.c.l.b16 %v766
      %v834 = vpack.c.b16 %v803, %v802
      %v835 = vpack.c.b16 %v805, %v804
      %v836 = vpack.c.b16 %v807, %v806
      %v837 = vpack.c.b16 %v809, %v808
      %v838 = vpack.c.b16 %v811, %v810
      %v839 = vpack.c.b16 %v813, %v812
      %v840 = vpack.c.b16 %v815, %v814
      %v841 = vpack.c.b16 %v817, %v816
      %v842 = vpack.c.b16 %v819, %v818
      %v843 = vpack.c.b16 %v821, %v820
      %v844 = vpack.c.b16 %v823, %v822
      %v845 = vpack.c.b16 %v825, %v824
      %v846 = vpack.c.b16 %v827, %v826
      %v847 = vpack.c.b16 %v829, %v828
      %v848 = vpack.c.b16 %v831, %v830
      %v849 = vpack.c.b16 %v833, %v832
      %v852 = vunpack.c.l.b16 %v768
      %v853 = vunpack.c.l.b16 %v769
      %v854 = vpack.c.b16 %v853, %v852
      %v856 = vsel %vm364, %v834, 0
      %v859 = vsel %vm364, %v835, 0
      %v862 = vsel %vm364, %v836, 0
      %v865 = vsel %vm364, %v837, 0
      %v868 = vsel %vm364, %v838, 0
      %v871 = vsel %vm364, %v839, 0
      %v874 = vsel %vm364, %v840, 0
      %v877 = vsel %vm364, %v841, 0
      %v880 = vsel %vm364, %v842, 0
      %v883 = vsel %vm364, %v843, 0
      %v886 = vsel %vm364, %v844, 0
      %v889 = vsel %vm364, %v845, 0
      %v892 = vsel %vm364, %v846, 0
      %v895 = vsel %vm364, %v847, 0
      %v898 = vsel %vm364, %v848, 0
      %v901 = vsel %vm364, %v849, 0
      %v904 = vsel %vm413, %v854, 0
      %906 = vmatpush.bf16.msra.mxu0 0
      %907 = vmatpush.bf16.msra.mxu0 0
      %908 = vmatpush.bf16.msra.mxu0 0
      %909 = vmatpush.bf16.msra.mxu0 0
      %910 = vmatpush.bf16.msra.mxu0 0
      %911 = vmatpush.bf16.msra.mxu0 0
      %912 = vmatpush.bf16.msra.mxu0 0
      %913 = vmatpush.bf16.msra.mxu0 %v904
      %914 = vmatmul.bf16.gmra.mxu0 %v856
      %v915 = vpop.f32.mrf.mxu0
      %v916 = vadd.f32 0.0, %v915
      %v917 = vpop.f32.mrf.mxu0
      %v918 = vadd.f32 0.0, %v917
      %919 = vmatmul.bf16.gmra.mxu0 %v859
      %v920 = vpop.f32.mrf.mxu0
      %v921 = vadd.f32 0.0, %v920
      %v922 = vpop.f32.mrf.mxu0
      %v923 = vadd.f32 0.0, %v922
      %924 = vmatmul.bf16.gmra.mxu0 %v862
      %v925 = vpop.f32.mrf.mxu0
      %v926 = vadd.f32 0.0, %v925
      %v927 = vpop.f32.mrf.mxu0
      %v928 = vadd.f32 0.0, %v927
      %929 = vmatmul.bf16.gmra.mxu0 %v865
      %v930 = vpop.f32.mrf.mxu0
      %v931 = vadd.f32 0.0, %v930
      %v932 = vpop.f32.mrf.mxu0
      %v933 = vadd.f32 0.0, %v932
      %934 = vmatmul.bf16.gmra.mxu0 %v868
      %v935 = vpop.f32.mrf.mxu0
      %v936 = vadd.f32 0.0, %v935
      %v937 = vpop.f32.mrf.mxu0
      %v938 = vadd.f32 0.0, %v937
      %939 = vmatmul.bf16.gmra.mxu0 %v871
      %v940 = vpop.f32.mrf.mxu0
      %v941 = vadd.f32 0.0, %v940
      %v942 = vpop.f32.mrf.mxu0
      %v943 = vadd.f32 0.0, %v942
      %944 = vmatmul.bf16.gmra.mxu0 %v874
      %v945 = vpop.f32.mrf.mxu0
      %v946 = vadd.f32 0.0, %v945
      %v947 = vpop.f32.mrf.mxu0
      %v948 = vadd.f32 0.0, %v947
      %949 = vmatmul.bf16.gmra.mxu0 %v877
      %v950 = vpop.f32.mrf.mxu0
      %v951 = vadd.f32 0.0, %v950
      %v952 = vpop.f32.mrf.mxu0
      %v953 = vadd.f32 0.0, %v952
      %954 = vmatmul.bf16.gmra.mxu0 %v880
      %v955 = vpop.f32.mrf.mxu0
      %v956 = vadd.f32 0.0, %v955
      %v957 = vpop.f32.mrf.mxu0
      %v958 = vadd.f32 0.0, %v957
      %959 = vmatmul.bf16.gmra.mxu0 %v883
      %v960 = vpop.f32.mrf.mxu0
      %v961 = vadd.f32 0.0, %v960
      %v962 = vpop.f32.mrf.mxu0
      %v963 = vadd.f32 0.0, %v962
      %964 = vmatmul.bf16.gmra.mxu0 %v886
      %v965 = vpop.f32.mrf.mxu0
      %v966 = vadd.f32 0.0, %v965
      %v967 = vpop.f32.mrf.mxu0
      %v968 = vadd.f32 0.0, %v967
      %969 = vmatmul.bf16.gmra.mxu0 %v889
      %v970 = vpop.f32.mrf.mxu0
      %v971 = vadd.f32 0.0, %v970
      %v972 = vpop.f32.mrf.mxu0
      %v973 = vadd.f32 0.0, %v972
      %974 = vmatmul.bf16.gmra.mxu0 %v892
      %v975 = vpop.f32.mrf.mxu0
      %v976 = vadd.f32 0.0, %v975
      %v977 = vpop.f32.mrf.mxu0
      %v978 = vadd.f32 0.0, %v977
      %979 = vmatmul.bf16.gmra.mxu0 %v895
      %v980 = vpop.f32.mrf.mxu0
      %v981 = vadd.f32 0.0, %v980
      %v982 = vpop.f32.mrf.mxu0
      %v983 = vadd.f32 0.0, %v982
      %984 = vmatmul.bf16.gmra.mxu0 %v898
      %v985 = vpop.f32.mrf.mxu0
      %v986 = vadd.f32 0.0, %v985
      %v987 = vpop.f32.mrf.mxu0
      %v988 = vadd.f32 0.0, %v987
      %989 = vmatmul.bf16.gmra.mxu0 %v901
      %v990 = vpop.f32.mrf.mxu0
      %v991 = vadd.f32 0.0, %v990
      %v992 = vpop.f32.mrf.mxu0
      %v993 = vadd.f32 0.0, %v992
      %994 = vdwg.mxu0
      %v995 = vadd.f32 %v652, %v916
      %v996 = vadd.f32 %v654, %v918
      %v997 = vadd.f32 %v657, %v921
      %v998 = vadd.f32 %v659, %v923
      %v999 = vadd.f32 %v662, %v926
      %v1000 = vadd.f32 %v664, %v928
      %v1001 = vadd.f32 %v667, %v931
      %v1002 = vadd.f32 %v669, %v933
      %v1003 = vadd.f32 %v672, %v936
      %v1004 = vadd.f32 %v674, %v938
      %v1005 = vadd.f32 %v677, %v941
      %v1006 = vadd.f32 %v679, %v943
      %v1007 = vadd.f32 %v682, %v946
      %v1008 = vadd.f32 %v684, %v948
      %v1009 = vadd.f32 %v687, %v951
      %v1010 = vadd.f32 %v689, %v953
      %v1011 = vadd.f32 %v692, %v956
      %v1012 = vadd.f32 %v694, %v958
      %v1013 = vadd.f32 %v697, %v961
      %v1014 = vadd.f32 %v699, %v963
      %v1015 = vadd.f32 %v702, %v966
      %v1016 = vadd.f32 %v704, %v968
      %v1017 = vadd.f32 %v707, %v971
      %v1018 = vadd.f32 %v709, %v973
      %v1019 = vadd.f32 %v712, %v976
      %v1020 = vadd.f32 %v714, %v978
      %v1021 = vadd.f32 %v717, %v981
      %v1022 = vadd.f32 %v719, %v983
      %v1023 = vadd.f32 %v722, %v986
      %v1024 = vadd.f32 %v724, %v988
      %v1025 = vadd.f32 %v727, %v991
      %v1026 = vadd.f32 %v729, %v993
      %v1027 = vpack.c.bf16 %v995, %v995
      %v1028 = vpack.c.bf16 %v996, %v996
      %v1029 = vpack.c.bf16 %v997, %v997
      %v1030 = vpack.c.bf16 %v998, %v998
      %v1031 = vpack.c.bf16 %v999, %v999
      %v1032 = vpack.c.bf16 %v1000, %v1000
      %v1033 = vpack.c.bf16 %v1001, %v1001
      %v1034 = vpack.c.bf16 %v1002, %v1002
      %v1035 = vpack.c.bf16 %v1003, %v1003
      %v1036 = vpack.c.bf16 %v1004, %v1004
      %v1037 = vpack.c.bf16 %v1005, %v1005
      %v1038 = vpack.c.bf16 %v1006, %v1006
      %v1039 = vpack.c.bf16 %v1007, %v1007
      %v1040 = vpack.c.bf16 %v1008, %v1008
      %v1041 = vpack.c.bf16 %v1009, %v1009
      %v1042 = vpack.c.bf16 %v1010, %v1010
      %v1043 = vpack.c.bf16 %v1011, %v1011
      %v1044 = vpack.c.bf16 %v1012, %v1012
      %v1045 = vpack.c.bf16 %v1013, %v1013
      %v1046 = vpack.c.bf16 %v1014, %v1014
      %v1047 = vpack.c.bf16 %v1015, %v1015
      %v1048 = vpack.c.bf16 %v1016, %v1016
      %v1049 = vpack.c.bf16 %v1017, %v1017
      %v1050 = vpack.c.bf16 %v1018, %v1018
      %v1051 = vpack.c.bf16 %v1019, %v1019
      %v1052 = vpack.c.bf16 %v1020, %v1020
      %v1053 = vpack.c.bf16 %v1021, %v1021
      %v1054 = vpack.c.bf16 %v1022, %v1022
      %v1055 = vpack.c.bf16 %v1023, %v1023
      %v1056 = vpack.c.bf16 %v1024, %v1024
      %v1057 = vpack.c.bf16 %v1025, %v1025
      %v1058 = vpack.c.bf16 %v1026, %v1026
      %1059 = vst [vmem:[%s199] sm:$0xf] %v1027
      %1060 = vst [vmem:[%s199 + $0x4] sm:$0xf] %v1028
      %1061 = vst [vmem:[%s199 + $0x8] sm:$0xf] %v1029
      %1062 = vst [vmem:[%s199 + $0xc] sm:$0xf] %v1030
      %1063 = vst [vmem:[%s199 + $0x10] sm:$0xf] %v1031
      %1064 = vst [vmem:[%s199 + $0x14] sm:$0xf] %v1032
      %1065 = vst [vmem:[%s199 + $0x18] sm:$0xf] %v1033
      %1066 = vst [vmem:[%s199 + $0x1c] sm:$0xf] %v1034
      %1067 = vst [vmem:[%s199 + $0x20] sm:$0xf] %v1035
      %1068 = vst [vmem:[%s199 + $0x24] sm:$0xf] %v1036
      %1069 = vst [vmem:[%s199 + $0x28] sm:$0xf] %v1037
      %1070 = vst [vmem:[%s199 + $0x2c] sm:$0xf] %v1038
      %1071 = vst [vmem:[%s199 + $0x30] sm:$0xf] %v1039
      %1072 = vst [vmem:[%s199 + $0x34] sm:$0xf] %v1040
      %1073 = vst [vmem:[%s199 + $0x38] sm:$0xf] %v1041
      %1074 = vst [vmem:[%s199 + $0x3c] sm:$0xf] %v1042
      %1075 = vst [vmem:[%s199 + $0x40] sm:$0xf] %v1043
      %1076 = vst [vmem:[%s199 + $0x44] sm:$0xf] %v1044
      %1077 = vst [vmem:[%s199 + $0x48] sm:$0xf] %v1045
      %1078 = vst [vmem:[%s199 + $0x4c] sm:$0xf] %v1046
      %1079 = vst [vmem:[%s199 + $0x50] sm:$0xf] %v1047
      %1080 = vst [vmem:[%s199 + $0x54] sm:$0xf] %v1048
      %1081 = vst [vmem:[%s199 + $0x58] sm:$0xf] %v1049
      %1082 = vst [vmem:[%s199 + $0x5c] sm:$0xf] %v1050
      %1083 = vst [vmem:[%s199 + $0x60] sm:$0xf] %v1051
      %1084 = vst [vmem:[%s199 + $0x64] sm:$0xf] %v1052
      %1085 = vst [vmem:[%s199 + $0x68] sm:$0xf] %v1053
      %1086 = vst [vmem:[%s199 + $0x6c] sm:$0xf] %v1054
      %1087 = vst [vmem:[%s199 + $0x70] sm:$0xf] %v1055
      %1088 = vst [vmem:[%s199 + $0x74] sm:$0xf] %v1056
      %1089 = vst [vmem:[%s199 + $0x78] sm:$0xf] %v1057
      %1090 = vst [vmem:[%s199 + $0x7c] sm:$0xf] %v1058
      %s1091 = smul.u32 16, %s20
      %p1092 = scmp.lt.s32.totalorder %s18, 1
      %s1093 = scalar_select %p1092, %s18, 1
      %p1094 = scmp.lt.s32.totalorder %s1091, 15
      %s1095 = scalar_select %p1094, %s1091, 15
      %p1096 = scmp.lt.s32.totalorder %s19, 0
      %s1097 = scalar_select %p1096, %s19, 0
      %s1098 = smul.addr %s1095, 2
      %s1099 = sadd.s32 %s1097, %s1098
      %s1100 = smul.addr %s1093, 32
      %s1101 = sadd.s32 %s1099, %s1100
      %s1102 = smul.addr %s1101, 4
      %s1103 = scalar_lea.vmem %s2, %s1102
      // Predicated region
      $region29: #{sparse_conv2d.1} parent=27 // pred_check
        %p1104 = pneg %p106
      $region30: #{sparse_conv2d.1} parent=27 // pred_check_branch
        %1106 = sbr.rel (%p1104) target = $region32
      $region31: #{sparse_conv2d.1} parent=27 // pred_region
        %s1107 = smul.u32 16, %s20
      $region32: #{sparse_conv2d.1} parent=27 // pred_fallthru
        _
    $region28: #{sparse_conv2d.1} parent=5 // pred_fallthru
      _
    %p1108 = scmp.le.s32.totalorder 2, %s8
    // Predicated region
    $region33: #{sparse_conv2d.1} parent=5 // pred_check
      %p1109 = pneg %p1108
    $region34: #{sparse_conv2d.1} parent=5 // pred_check_branch
      %1111 = sbr.rel (%p1109) target = $region36
    $region35: #{sparse_conv2d.1} parent=5 // pred_region
      %s1112 = ssub.s32 %s8, 2
      // Predicated region
      $region37: #{sparse_conv2d.1} parent=35 // pred_check
        %p1113 = pneg %p112
      $region38: #{sparse_conv2d.1} parent=35 // pred_check_branch
        %1115 = sbr.rel (%p1113) target = $region40
      $region39: #{sparse_conv2d.1} parent=35 // pred_region
        %s1116 = smul.u32 16, %s23
        %p1117 = scmp.lt.s32.totalorder %s21, 1
        %s1118 = scalar_select %p1117, %s21, 1
        %p1119 = scmp.lt.s32.totalorder %s1116, 15
        %s1120 = scalar_select %p1119, %s1116, 15
        %p1121 = scmp.lt.s32.totalorder %s22, 0
        %s1122 = scalar_select %p1121, %s22, 0
        %s1123 = smul.addr %s1120, 2
        %s1124 = sadd.s32 %s1122, %s1123
        %s1125 = smul.addr %s1118, 32
        %s1126 = sadd.s32 %s1124, %s1125
        %s1127 = smul.addr %s1126, 4
        %s1128 = scalar_lea.vmem %s2, %s1127
      $region40: #{sparse_conv2d.1} parent=35 // pred_fallthru
        _
    $region36: #{sparse_conv2d.1} parent=5 // pred_fallthru
      _
  $region6: #{sparse_conv2d.1} parent=0 // loop_footer
    %s12 = sadd.s32 1, %s8
  $region7: #{sparse_conv2d.1} parent=0 // loop_footer_branch
    %7 = sbr.rel target = $region3
  $region8: #{sparse_conv2d.1} parent=0 // loop_exit
    _

</llo_original>
